<compile_context>
chip_gen: v7x
topology: tpu7x:2x2x1
jax: 0.10.0
libtpu: 0.0.40
codegen_flags: <defaults>
</compile_context>

<pallas_src>
import jax
import jax.numpy as jnp
from jax.experimental import pallas as pl
from jax.experimental.pallas import tpu as pltpu

EPS = 1e-5


def resnet_block_kernel(x_ref,
                        w8_ref, b8_ref, w5_ref, b5_ref, w3_ref, b3_ref,
                        ws_ref, bs_ref,
                        g8_ref, be8_ref, g5_ref, be5_ref, g3_ref, be3_ref,
                        o_ref):
    N, CP, L = x_ref.shape
    COUT = o_ref.shape[1]
    inv_cnt = 1.0 / float(N * L)

    def tap_shift(h, s):
        # h: (N, C, L) f32 value.  Returns g with g[:, :, l] = h[:, :, l + s]
        # (zero where l + s is out of range): 'same' padding without a scratch.
        if s == 0:
            return h
        n, c, l = h.shape
        z = jnp.zeros((n, c, abs(s)), h.dtype)
        if s > 0:
            return jnp.concatenate([h[:, :, s:], z], axis=2)
        return jnp.concatenate([z, h[:, :, :l + s]], axis=2)

    def conv_same(h, w_ref, b_ref):
        # h: (N, C, L) f32; w_ref: (COUT, K*C) bf16 with tap-major columns
        # (column k*C + c == W_torch[o, c, k]); b_ref: (COUT, 1) f32.
        # One im2col matmul, batched over N, bf16 operands / f32 accumulation.
        n, c, l = h.shape
        k_taps = w_ref.shape[1] // c
        left = (k_taps - 1) // 2                      # PyTorch 'same' left pad
        if k_taps > 1:
            col = jnp.concatenate(
                [tap_shift(h, k - left) for k in range(k_taps)], axis=1)
        else:
            col = h                                   # (N, K*C, L)
        w = jnp.broadcast_to(w_ref[...], (n, COUT, k_taps * c))
        out = jnp.einsum('nok,nkl->nol', w, col.astype(jnp.bfloat16),
                         preferred_element_type=jnp.float32)    # (N, COUT, L) f32
        return out + b_ref[...]

    def _sum_nl(t):                                   # reduce over (N, L)
        return jnp.sum(jnp.sum(t, axis=2, keepdims=True), axis=0, keepdims=True)

    def bn_act(h, g_ref, be_ref, relu):
        # Training-mode BatchNorm1d: batch stats over (N, L), biased variance,
        # fused into a single scale/shift FMA.  All statistics in f32.
        mean = _sum_nl(h) * inv_cnt                                  # (1, COUT, 1)
        var = jnp.maximum(_sum_nl(h * h) * inv_cnt - mean * mean, 0.0)
        scale = g_ref[...] * jax.lax.rsqrt(var + EPS)                # (1, COUT, 1)
        shift = be_ref[...] - mean * scale
        y = h * scale + shift
        return jnp.maximum(y, 0.0) if relu else y

    x = x_ref[...]                                                   # (N, CP, L)

    # main branch
    h = bn_act(conv_same(x, w8_ref, b8_ref), g8_ref, be8_ref, relu=True)
    h = bn_act(conv_same(h, w5_ref, b5_ref), g5_ref, be5_ref, relu=True)
    h = bn_act(conv_same(h, w3_ref, b3_ref), g3_ref, be3_ref, relu=False)  # conv_3 has k=8

    # shortcut branch (bn_8 parameters reused, fresh batch statistics)
    s = bn_act(conv_same(x, ws_ref, bs_ref), g8_ref, be8_ref, relu=False)

    o_ref[...] = jnp.maximum(h + s, 0.0).astype(o_ref.dtype)


def resnet_block_forward(x_ncl, params):
    """x_ncl: (N, C_in, L) float32, PyTorch NCL layout.  Returns (N, C_out, L)."""
    N, CIN, L = x_ncl.shape
    COUT = params["w8"].shape[0]
    CP = ((CIN + 7) // 8) * 8        # pad input channels to a sublane multiple

    x = x_ncl.astype(jnp.float32)
    if CP != CIN:
        # At real scale pick C_in as a multiple of 8 instead of padding here.
        x = jnp.pad(x, ((0, 0), (0, CP - CIN), (0, 0)))

    def prep_w(w, cpad):
        # (Cout, Cin, K) -> (Cout, K*Cpad) bf16, column index = k*Cpad + c.
        cout, cin, k = w.shape
        if cpad != cin:
            w = jnp.pad(w, ((0, 0), (0, cpad - cin), (0, 0)))
        return jnp.transpose(w, (0, 2, 1)).reshape(cout, k * cpad).astype(jnp.bfloat16)

    def cvec(v):                     # per-channel params: channels on sublanes
        return v.reshape(-1, 1).astype(jnp.float32)

    args = (x,
            prep_w(params["w8"], CP), cvec(params["b8"]),
            prep_w(params["w5"], COUT), cvec(params["b5"]),
            prep_w(params["w3"], COUT), cvec(params["b3"]),
            prep_w(params["ws"], CP), cvec(params["bs"]),
            cvec(params["g8"]), cvec(params["be8"]),
            cvec(params["g5"]), cvec(params["be5"]),
            cvec(params["g3"]), cvec(params["be3"]))

    return pl.pallas_call(
        resnet_block_kernel,
        out_shape=jax.ShapeDtypeStruct((N, COUT, L), jnp.float32),
        in_specs=[pl.BlockSpec(memory_space=pltpu.MemorySpace.VMEM)] * len(args),
        out_specs=pl.BlockSpec(memory_space=pltpu.MemorySpace.VMEM),
        compiler_params=pltpu.CompilerParams(vmem_limit_bytes=32 * 1024 * 1024),
    )(*args)


# ---------------- pure-JAX reference (for correctness check) ----------------
# Mirrors the kernel's precision policy: bf16 matmul operands, f32 accumulation,
# f32 BatchNorm statistics (training mode, biased variance).
def ref_forward(x_ncl, params):
    x = x_ncl.astype(jnp.float32)

    def conv(h, w, b):
        K = w.shape[2]
        left = (K - 1) // 2
        right = K - 1 - left
        L = h.shape[2]
        hp = jnp.pad(h, ((0, 0), (0, 0), (left, right))).astype(jnp.bfloat16)
        wb = w.astype(jnp.bfloat16)
        out = sum(jnp.einsum('oc,ncl->nol', wb[:, :, k], hp[:, :, k:k + L],
                             preferred_element_type=jnp.float32)
                  for k in range(K))
        return out + b[None, :, None]

    def bn(h, g, be):
        m = h.mean(axis=(0, 2), keepdims=True)
        v = ((h - m) ** 2).mean(axis=(0, 2), keepdims=True)
        return (h - m) * jax.lax.rsqrt(v + EPS) * g[None, :, None] + be[None, :, None]

    relu = lambda t: jnp.maximum(t, 0.0)
    cx = relu(bn(conv(x, params["w8"], params["b8"]), params["g8"], params["be8"]))
    cy = relu(bn(conv(cx, params["w5"], params["b5"]), params["g5"], params["be5"]))
    cz = bn(conv(cy, params["w3"], params["b3"]), params["g3"], params["be3"])
    sc = bn(conv(x, params["ws"], params["bs"]), params["g8"], params["be8"])
    return relu(sc + cz)


if __name__ == "__main__":
    # small shapes: batch=2, dimension_num=4, out_channels=8, length=16
    N, CIN, COUT, L = 2, 4, 8, 16
    key = jax.random.PRNGKey(0)
    ks = jax.random.split(key, 16)

    params = {
        "w8": 0.1 * jax.random.normal(ks[0], (COUT, CIN, 8), jnp.float32),
        "b8": 0.1 * jax.random.normal(ks[1], (COUT,), jnp.float32),
        "w5": 0.1 * jax.random.normal(ks[2], (COUT, COUT, 5), jnp.float32),
        "b5": 0.1 * jax.random.normal(ks[3], (COUT,), jnp.float32),
        "w3": 0.1 * jax.random.normal(ks[4], (COUT, COUT, 8), jnp.float32),  # conv_3 has k=8
        "b3": 0.1 * jax.random.normal(ks[5], (COUT,), jnp.float32),
        "ws": 0.1 * jax.random.normal(ks[6], (COUT, CIN, 1), jnp.float32),
        "bs": 0.1 * jax.random.normal(ks[7], (COUT,), jnp.float32),
        "g8": 1.0 + 0.1 * jax.random.normal(ks[8], (COUT,), jnp.float32),
        "be8": 0.1 * jax.random.normal(ks[9], (COUT,), jnp.float32),
        "g5": 1.0 + 0.1 * jax.random.normal(ks[10], (COUT,), jnp.float32),
        "be5": 0.1 * jax.random.normal(ks[11], (COUT,), jnp.float32),
        "g3": 1.0 + 0.1 * jax.random.normal(ks[12], (COUT,), jnp.float32),
        "be3": 0.1 * jax.random.normal(ks[13], (COUT,), jnp.float32),
    }
    x = jax.random.normal(ks[14], (N, CIN, L), jnp.float32)   # PyTorch NCL input

    out = jax.block_until_ready(resnet_block_forward(x, params))
    ref = jax.block_until_ready(ref_forward(x, params))

    assert out.shape == (N, COUT, L), out.shape
    assert bool(jnp.all(jnp.isfinite(out)))
    max_err = float(jnp.max(jnp.abs(out - ref)))
    assert bool(jnp.allclose(out, ref, rtol=2e-2, atol=2e-2)), max_err

    print("KERNEL_OK")
</pallas_src>

<mosaic_0001>
module attributes {stable_mosaic.version = 11 : i64} {
  func.func @resnet_block_kernel(%arg0: memref<2x8x16xf32, #tpu.memory_space<vmem>>, %arg1: memref<8x64xbf16, #tpu.memory_space<vmem>>, %arg2: memref<8x1xf32, #tpu.memory_space<vmem>>, %arg3: memref<8x40xbf16, #tpu.memory_space<vmem>>, %arg4: memref<8x1xf32, #tpu.memory_space<vmem>>, %arg5: memref<8x64xbf16, #tpu.memory_space<vmem>>, %arg6: memref<8x1xf32, #tpu.memory_space<vmem>>, %arg7: memref<8x8xbf16, #tpu.memory_space<vmem>>, %arg8: memref<8x1xf32, #tpu.memory_space<vmem>>, %arg9: memref<8x1xf32, #tpu.memory_space<vmem>>, %arg10: memref<8x1xf32, #tpu.memory_space<vmem>>, %arg11: memref<8x1xf32, #tpu.memory_space<vmem>>, %arg12: memref<8x1xf32, #tpu.memory_space<vmem>>, %arg13: memref<8x1xf32, #tpu.memory_space<vmem>>, %arg14: memref<8x1xf32, #tpu.memory_space<vmem>>, %arg15: memref<2x8x16xf32, #tpu.memory_space<vmem>>) attributes {dimension_semantics = [], scalar_prefetch = 0 : i64, scratch_operands = 0 : i64, tpu.core_type = #tpu.core_type<tc>} {
    %c0 = arith.constant 0 : index
    %c0_0 = arith.constant 0 : index
    %c0_1 = arith.constant 0 : index
    %0 = vector.load %arg0[%c0, %c0_0, %c0_1] : memref<2x8x16xf32, #tpu.memory_space<vmem>>, vector<2x8x16xf32>
    %cst = arith.constant 0.000000e+00 : f32
    %1 = vector.broadcast %cst : f32 to vector<2x8x3xf32>
    %2 = vector.extract_strided_slice %0 {offsets = [0, 0, 0], sizes = [2, 8, 13], strides = [1, 1, 1]} : vector<2x8x16xf32> to vector<2x8x13xf32>
    %3 = tpu.concatenate %1, %2 in 2 : vector<2x8x3xf32>, vector<2x8x13xf32> -> vector<2x8x16xf32>
    %cst_2 = arith.constant 0.000000e+00 : f32
    %4 = vector.broadcast %cst_2 : f32 to vector<2x8x2xf32>
    %5 = vector.extract_strided_slice %0 {offsets = [0, 0, 0], sizes = [2, 8, 14], strides = [1, 1, 1]} : vector<2x8x16xf32> to vector<2x8x14xf32>
    %6 = tpu.concatenate %4, %5 in 2 : vector<2x8x2xf32>, vector<2x8x14xf32> -> vector<2x8x16xf32>
    %cst_3 = arith.constant 0.000000e+00 : f32
    %7 = vector.broadcast %cst_3 : f32 to vector<2x8x1xf32>
    %8 = vector.extract_strided_slice %0 {offsets = [0, 0, 0], sizes = [2, 8, 15], strides = [1, 1, 1]} : vector<2x8x16xf32> to vector<2x8x15xf32>
    %9 = tpu.concatenate %7, %8 in 2 : vector<2x8x1xf32>, vector<2x8x15xf32> -> vector<2x8x16xf32>
    %cst_4 = arith.constant 0.000000e+00 : f32
    %10 = vector.broadcast %cst_4 : f32 to vector<2x8x1xf32>
    %11 = vector.extract_strided_slice %0 {offsets = [0, 0, 1], sizes = [2, 8, 15], strides = [1, 1, 1]} : vector<2x8x16xf32> to vector<2x8x15xf32>
    %12 = tpu.concatenate %11, %10 in 2 : vector<2x8x15xf32>, vector<2x8x1xf32> -> vector<2x8x16xf32>
    %cst_5 = arith.constant 0.000000e+00 : f32
    %13 = vector.broadcast %cst_5 : f32 to vector<2x8x2xf32>
    %14 = vector.extract_strided_slice %0 {offsets = [0, 0, 2], sizes = [2, 8, 14], strides = [1, 1, 1]} : vector<2x8x16xf32> to vector<2x8x14xf32>
    %15 = tpu.concatenate %14, %13 in 2 : vector<2x8x14xf32>, vector<2x8x2xf32> -> vector<2x8x16xf32>
    %cst_6 = arith.constant 0.000000e+00 : f32
    %16 = vector.broadcast %cst_6 : f32 to vector<2x8x3xf32>
    %17 = vector.extract_strided_slice %0 {offsets = [0, 0, 3], sizes = [2, 8, 13], strides = [1, 1, 1]} : vector<2x8x16xf32> to vector<2x8x13xf32>
    %18 = tpu.concatenate %17, %16 in 2 : vector<2x8x13xf32>, vector<2x8x3xf32> -> vector<2x8x16xf32>
    %cst_7 = arith.constant 0.000000e+00 : f32
    %19 = vector.broadcast %cst_7 : f32 to vector<2x8x4xf32>
    %20 = vector.extract_strided_slice %0 {offsets = [0, 0, 4], sizes = [2, 8, 12], strides = [1, 1, 1]} : vector<2x8x16xf32> to vector<2x8x12xf32>
    %21 = tpu.concatenate %20, %19 in 2 : vector<2x8x12xf32>, vector<2x8x4xf32> -> vector<2x8x16xf32>
    %22 = tpu.concatenate %3, %6, %9, %0, %12, %15, %18, %21 in 1 : vector<2x8x16xf32>, vector<2x8x16xf32>, vector<2x8x16xf32>, vector<2x8x16xf32>, vector<2x8x16xf32>, vector<2x8x16xf32>, vector<2x8x16xf32>, vector<2x8x16xf32> -> vector<2x64x16xf32>
    %c0_8 = arith.constant 0 : index
    %c0_9 = arith.constant 0 : index
    %23 = vector.load %arg1[%c0_8, %c0_9] : memref<8x64xbf16, #tpu.memory_space<vmem>>, vector<8x64xbf16>
    %24 = vector.shape_cast %23 : vector<8x64xbf16> to vector<1x8x64xbf16>
    %25 = vector.broadcast %24 : vector<1x8x64xbf16> to vector<2x8x64xbf16>
    %26 = arith.truncf %22 : vector<2x64x16xf32> to vector<2x64x16xbf16>
    "tpu.trace_start"() <{level = 10 : i32, message = "nok,nkl->nol"}> : () -> ()
    %cst_10 = arith.constant dense<0.000000e+00> : vector<2x8x16xf32>
    %27 = tpu.matmul %25, %26, %cst_10 {dimension_numbers = #tpu.dot_dimension_numbers<[2], [1], [1], [2], [0, 0, 0, 1, 1, 2], [0], [0]>} : vector<2x8x64xbf16>, vector<2x64x16xbf16>, vector<2x8x16xf32> -> vector<2x8x16xf32>
    "tpu.trace_stop"() : () -> ()
    %c0_11 = arith.constant 0 : index
    %c0_12 = arith.constant 0 : index
    %28 = vector.load %arg2[%c0_11, %c0_12] : memref<8x1xf32, #tpu.memory_space<vmem>>, vector<8x1xf32>
    %29 = vector.shape_cast %28 : vector<8x1xf32> to vector<1x8x1xf32>
    %30 = vector.broadcast %29 : vector<1x8x1xf32> to vector<2x8x16xf32>
    %31 = arith.addf %27, %30 : vector<2x8x16xf32>
    %cst_13 = arith.constant dense<0.000000e+00> : vector<2x8xf32>
    %32 = vector.multi_reduction <add>, %31, %cst_13 [2] : vector<2x8x16xf32> to vector<2x8xf32>
    %33 = vector.shape_cast %32 : vector<2x8xf32> to vector<2x8x1xf32>
    %cst_14 = arith.constant dense<0.000000e+00> : vector<8x1xf32>
    %34 = vector.multi_reduction <add>, %33, %cst_14 [0] : vector<2x8x1xf32> to vector<8x1xf32>
    %35 = vector.shape_cast %34 : vector<8x1xf32> to vector<1x8x1xf32>
    %cst_15 = arith.constant 3.125000e-02 : f32
    %36 = vector.broadcast %cst_15 : f32 to vector<1x8x1xf32>
    %37 = arith.mulf %35, %36 : vector<1x8x1xf32>
    %38 = arith.mulf %31, %31 : vector<2x8x16xf32>
    %cst_16 = arith.constant dense<0.000000e+00> : vector<2x8xf32>
    %39 = vector.multi_reduction <add>, %38, %cst_16 [2] : vector<2x8x16xf32> to vector<2x8xf32>
    %40 = vector.shape_cast %39 : vector<2x8xf32> to vector<2x8x1xf32>
    %cst_17 = arith.constant dense<0.000000e+00> : vector<8x1xf32>
    %41 = vector.multi_reduction <add>, %40, %cst_17 [0] : vector<2x8x1xf32> to vector<8x1xf32>
    %42 = vector.shape_cast %41 : vector<8x1xf32> to vector<1x8x1xf32>
    %cst_18 = arith.constant 3.125000e-02 : f32
    %43 = vector.broadcast %cst_18 : f32 to vector<1x8x1xf32>
    %44 = arith.mulf %42, %43 : vector<1x8x1xf32>
    %45 = arith.mulf %37, %37 : vector<1x8x1xf32>
    %46 = arith.subf %44, %45 : vector<1x8x1xf32>
    %cst_19 = arith.constant 0.000000e+00 : f32
    %47 = vector.broadcast %cst_19 : f32 to vector<1x8x1xf32>
    %48 = arith.maximumf %46, %47 : vector<1x8x1xf32>
    %c0_20 = arith.constant 0 : index
    %c0_21 = arith.constant 0 : index
    %49 = vector.load %arg9[%c0_20, %c0_21] : memref<8x1xf32, #tpu.memory_space<vmem>>, vector<8x1xf32>
    %cst_22 = arith.constant 9.99999974E-6 : f32
    %50 = vector.broadcast %cst_22 : f32 to vector<1x8x1xf32>
    %51 = arith.addf %48, %50 : vector<1x8x1xf32>
    %52 = math.rsqrt %51 : vector<1x8x1xf32>
    %53 = vector.shape_cast %49 : vector<8x1xf32> to vector<1x8x1xf32>
    %54 = arith.mulf %53, %52 : vector<1x8x1xf32>
    %c0_23 = arith.constant 0 : index
    %c0_24 = arith.constant 0 : index
    %55 = vector.load %arg10[%c0_23, %c0_24] : memref<8x1xf32, #tpu.memory_space<vmem>>, vector<8x1xf32>
    %56 = arith.mulf %37, %54 : vector<1x8x1xf32>
    %57 = vector.shape_cast %55 : vector<8x1xf32> to vector<1x8x1xf32>
    %58 = arith.subf %57, %56 : vector<1x8x1xf32>
    %59 = vector.broadcast %54 : vector<1x8x1xf32> to vector<2x8x16xf32>
    %60 = arith.mulf %31, %59 : vector<2x8x16xf32>
    %61 = vector.broadcast %58 : vector<1x8x1xf32> to vector<2x8x16xf32>
    %62 = arith.addf %60, %61 : vector<2x8x16xf32>
    %cst_25 = arith.constant 0.000000e+00 : f32
    %63 = vector.broadcast %cst_25 : f32 to vector<2x8x16xf32>
    %64 = arith.maximumf %62, %63 : vector<2x8x16xf32>
    %cst_26 = arith.constant 0.000000e+00 : f32
    %65 = vector.broadcast %cst_26 : f32 to vector<2x8x2xf32>
    %66 = vector.extract_strided_slice %64 {offsets = [0, 0, 0], sizes = [2, 8, 14], strides = [1, 1, 1]} : vector<2x8x16xf32> to vector<2x8x14xf32>
    %67 = tpu.concatenate %65, %66 in 2 : vector<2x8x2xf32>, vector<2x8x14xf32> -> vector<2x8x16xf32>
    %cst_27 = arith.constant 0.000000e+00 : f32
    %68 = vector.broadcast %cst_27 : f32 to vector<2x8x1xf32>
    %69 = vector.extract_strided_slice %64 {offsets = [0, 0, 0], sizes = [2, 8, 15], strides = [1, 1, 1]} : vector<2x8x16xf32> to vector<2x8x15xf32>
    %70 = tpu.concatenate %68, %69 in 2 : vector<2x8x1xf32>, vector<2x8x15xf32> -> vector<2x8x16xf32>
    %cst_28 = arith.constant 0.000000e+00 : f32
    %71 = vector.broadcast %cst_28 : f32 to vector<2x8x1xf32>
    %72 = vector.extract_strided_slice %64 {offsets = [0, 0, 1], sizes = [2, 8, 15], strides = [1, 1, 1]} : vector<2x8x16xf32> to vector<2x8x15xf32>
    %73 = tpu.concatenate %72, %71 in 2 : vector<2x8x15xf32>, vector<2x8x1xf32> -> vector<2x8x16xf32>
    %cst_29 = arith.constant 0.000000e+00 : f32
    %74 = vector.broadcast %cst_29 : f32 to vector<2x8x2xf32>
    %75 = vector.extract_strided_slice %64 {offsets = [0, 0, 2], sizes = [2, 8, 14], strides = [1, 1, 1]} : vector<2x8x16xf32> to vector<2x8x14xf32>
    %76 = tpu.concatenate %75, %74 in 2 : vector<2x8x14xf32>, vector<2x8x2xf32> -> vector<2x8x16xf32>
    %77 = tpu.concatenate %67, %70, %64, %73, %76 in 1 : vector<2x8x16xf32>, vector<2x8x16xf32>, vector<2x8x16xf32>, vector<2x8x16xf32>, vector<2x8x16xf32> -> vector<2x40x16xf32>
    %c0_30 = arith.constant 0 : index
    %c0_31 = arith.constant 0 : index
    %78 = vector.load %arg3[%c0_30, %c0_31] : memref<8x40xbf16, #tpu.memory_space<vmem>>, vector<8x40xbf16>
    %79 = vector.shape_cast %78 : vector<8x40xbf16> to vector<1x8x40xbf16>
    %80 = vector.broadcast %79 : vector<1x8x40xbf16> to vector<2x8x40xbf16>
    %81 = arith.truncf %77 : vector<2x40x16xf32> to vector<2x40x16xbf16>
    "tpu.trace_start"() <{level = 10 : i32, message = "nok,nkl->nol"}> : () -> ()
    %cst_32 = arith.constant dense<0.000000e+00> : vector<2x8x16xf32>
    %82 = tpu.matmul %80, %81, %cst_32 {dimension_numbers = #tpu.dot_dimension_numbers<[2], [1], [1], [2], [0, 0, 0, 1, 1, 2], [0], [0]>} : vector<2x8x40xbf16>, vector<2x40x16xbf16>, vector<2x8x16xf32> -> vector<2x8x16xf32>
    "tpu.trace_stop"() : () -> ()
    %c0_33 = arith.constant 0 : index
    %c0_34 = arith.constant 0 : index
    %83 = vector.load %arg4[%c0_33, %c0_34] : memref<8x1xf32, #tpu.memory_space<vmem>>, vector<8x1xf32>
    %84 = vector.shape_cast %83 : vector<8x1xf32> to vector<1x8x1xf32>
    %85 = vector.broadcast %84 : vector<1x8x1xf32> to vector<2x8x16xf32>
    %86 = arith.addf %82, %85 : vector<2x8x16xf32>
    %cst_35 = arith.constant dense<0.000000e+00> : vector<2x8xf32>
    %87 = vector.multi_reduction <add>, %86, %cst_35 [2] : vector<2x8x16xf32> to vector<2x8xf32>
    %88 = vector.shape_cast %87 : vector<2x8xf32> to vector<2x8x1xf32>
    %cst_36 = arith.constant dense<0.000000e+00> : vector<8x1xf32>
    %89 = vector.multi_reduction <add>, %88, %cst_36 [0] : vector<2x8x1xf32> to vector<8x1xf32>
    %90 = vector.shape_cast %89 : vector<8x1xf32> to vector<1x8x1xf32>
    %cst_37 = arith.constant 3.125000e-02 : f32
    %91 = vector.broadcast %cst_37 : f32 to vector<1x8x1xf32>
    %92 = arith.mulf %90, %91 : vector<1x8x1xf32>
    %93 = arith.mulf %86, %86 : vector<2x8x16xf32>
    %cst_38 = arith.constant dense<0.000000e+00> : vector<2x8xf32>
    %94 = vector.multi_reduction <add>, %93, %cst_38 [2] : vector<2x8x16xf32> to vector<2x8xf32>
    %95 = vector.shape_cast %94 : vector<2x8xf32> to vector<2x8x1xf32>
    %cst_39 = arith.constant dense<0.000000e+00> : vector<8x1xf32>
    %96 = vector.multi_reduction <add>, %95, %cst_39 [0] : vector<2x8x1xf32> to vector<8x1xf32>
    %97 = vector.shape_cast %96 : vector<8x1xf32> to vector<1x8x1xf32>
    %cst_40 = arith.constant 3.125000e-02 : f32
    %98 = vector.broadcast %cst_40 : f32 to vector<1x8x1xf32>
    %99 = arith.mulf %97, %98 : vector<1x8x1xf32>
    %100 = arith.mulf %92, %92 : vector<1x8x1xf32>
    %101 = arith.subf %99, %100 : vector<1x8x1xf32>
    %cst_41 = arith.constant 0.000000e+00 : f32
    %102 = vector.broadcast %cst_41 : f32 to vector<1x8x1xf32>
    %103 = arith.maximumf %101, %102 : vector<1x8x1xf32>
    %c0_42 = arith.constant 0 : index
    %c0_43 = arith.constant 0 : index
    %104 = vector.load %arg11[%c0_42, %c0_43] : memref<8x1xf32, #tpu.memory_space<vmem>>, vector<8x1xf32>
    %cst_44 = arith.constant 9.99999974E-6 : f32
    %105 = vector.broadcast %cst_44 : f32 to vector<1x8x1xf32>
    %106 = arith.addf %103, %105 : vector<1x8x1xf32>
    %107 = math.rsqrt %106 : vector<1x8x1xf32>
    %108 = vector.shape_cast %104 : vector<8x1xf32> to vector<1x8x1xf32>
    %109 = arith.mulf %108, %107 : vector<1x8x1xf32>
    %c0_45 = arith.constant 0 : index
    %c0_46 = arith.constant 0 : index
    %110 = vector.load %arg12[%c0_45, %c0_46] : memref<8x1xf32, #tpu.memory_space<vmem>>, vector<8x1xf32>
    %111 = arith.mulf %92, %109 : vector<1x8x1xf32>
    %112 = vector.shape_cast %110 : vector<8x1xf32> to vector<1x8x1xf32>
    %113 = arith.subf %112, %111 : vector<1x8x1xf32>
    %114 = vector.broadcast %109 : vector<1x8x1xf32> to vector<2x8x16xf32>
    %115 = arith.mulf %86, %114 : vector<2x8x16xf32>
    %116 = vector.broadcast %113 : vector<1x8x1xf32> to vector<2x8x16xf32>
    %117 = arith.addf %115, %116 : vector<2x8x16xf32>
    %cst_47 = arith.constant 0.000000e+00 : f32
    %118 = vector.broadcast %cst_47 : f32 to vector<2x8x16xf32>
    %119 = arith.maximumf %117, %118 : vector<2x8x16xf32>
    %cst_48 = arith.constant 0.000000e+00 : f32
    %120 = vector.broadcast %cst_48 : f32 to vector<2x8x3xf32>
    %121 = vector.extract_strided_slice %119 {offsets = [0, 0, 0], sizes = [2, 8, 13], strides = [1, 1, 1]} : vector<2x8x16xf32> to vector<2x8x13xf32>
    %122 = tpu.concatenate %120, %121 in 2 : vector<2x8x3xf32>, vector<2x8x13xf32> -> vector<2x8x16xf32>
    %cst_49 = arith.constant 0.000000e+00 : f32
    %123 = vector.broadcast %cst_49 : f32 to vector<2x8x2xf32>
    %124 = vector.extract_strided_slice %119 {offsets = [0, 0, 0], sizes = [2, 8, 14], strides = [1, 1, 1]} : vector<2x8x16xf32> to vector<2x8x14xf32>
    %125 = tpu.concatenate %123, %124 in 2 : vector<2x8x2xf32>, vector<2x8x14xf32> -> vector<2x8x16xf32>
    %cst_50 = arith.constant 0.000000e+00 : f32
    %126 = vector.broadcast %cst_50 : f32 to vector<2x8x1xf32>
    %127 = vector.extract_strided_slice %119 {offsets = [0, 0, 0], sizes = [2, 8, 15], strides = [1, 1, 1]} : vector<2x8x16xf32> to vector<2x8x15xf32>
    %128 = tpu.concatenate %126, %127 in 2 : vector<2x8x1xf32>, vector<2x8x15xf32> -> vector<2x8x16xf32>
    %cst_51 = arith.constant 0.000000e+00 : f32
    %129 = vector.broadcast %cst_51 : f32 to vector<2x8x1xf32>
    %130 = vector.extract_strided_slice %119 {offsets = [0, 0, 1], sizes = [2, 8, 15], strides = [1, 1, 1]} : vector<2x8x16xf32> to vector<2x8x15xf32>
    %131 = tpu.concatenate %130, %129 in 2 : vector<2x8x15xf32>, vector<2x8x1xf32> -> vector<2x8x16xf32>
    %cst_52 = arith.constant 0.000000e+00 : f32
    %132 = vector.broadcast %cst_52 : f32 to vector<2x8x2xf32>
    %133 = vector.extract_strided_slice %119 {offsets = [0, 0, 2], sizes = [2, 8, 14], strides = [1, 1, 1]} : vector<2x8x16xf32> to vector<2x8x14xf32>
    %134 = tpu.concatenate %133, %132 in 2 : vector<2x8x14xf32>, vector<2x8x2xf32> -> vector<2x8x16xf32>
    %cst_53 = arith.constant 0.000000e+00 : f32
    %135 = vector.broadcast %cst_53 : f32 to vector<2x8x3xf32>
    %136 = vector.extract_strided_slice %119 {offsets = [0, 0, 3], sizes = [2, 8, 13], strides = [1, 1, 1]} : vector<2x8x16xf32> to vector<2x8x13xf32>
    %137 = tpu.concatenate %136, %135 in 2 : vector<2x8x13xf32>, vector<2x8x3xf32> -> vector<2x8x16xf32>
    %cst_54 = arith.constant 0.000000e+00 : f32
    %138 = vector.broadcast %cst_54 : f32 to vector<2x8x4xf32>
    %139 = vector.extract_strided_slice %119 {offsets = [0, 0, 4], sizes = [2, 8, 12], strides = [1, 1, 1]} : vector<2x8x16xf32> to vector<2x8x12xf32>
    %140 = tpu.concatenate %139, %138 in 2 : vector<2x8x12xf32>, vector<2x8x4xf32> -> vector<2x8x16xf32>
    %141 = tpu.concatenate %122, %125, %128, %119, %131, %134, %137, %140 in 1 : vector<2x8x16xf32>, vector<2x8x16xf32>, vector<2x8x16xf32>, vector<2x8x16xf32>, vector<2x8x16xf32>, vector<2x8x16xf32>, vector<2x8x16xf32>, vector<2x8x16xf32> -> vector<2x64x16xf32>
    %c0_55 = arith.constant 0 : index
    %c0_56 = arith.constant 0 : index
    %142 = vector.load %arg5[%c0_55, %c0_56] : memref<8x64xbf16, #tpu.memory_space<vmem>>, vector<8x64xbf16>
    %143 = vector.shape_cast %142 : vector<8x64xbf16> to vector<1x8x64xbf16>
    %144 = vector.broadcast %143 : vector<1x8x64xbf16> to vector<2x8x64xbf16>
    %145 = arith.truncf %141 : vector<2x64x16xf32> to vector<2x64x16xbf16>
    "tpu.trace_start"() <{level = 10 : i32, message = "nok,nkl->nol"}> : () -> ()
    %cst_57 = arith.constant dense<0.000000e+00> : vector<2x8x16xf32>
    %146 = tpu.matmul %144, %145, %cst_57 {dimension_numbers = #tpu.dot_dimension_numbers<[2], [1], [1], [2], [0, 0, 0, 1, 1, 2], [0], [0]>} : vector<2x8x64xbf16>, vector<2x64x16xbf16>, vector<2x8x16xf32> -> vector<2x8x16xf32>
    "tpu.trace_stop"() : () -> ()
    %c0_58 = arith.constant 0 : index
    %c0_59 = arith.constant 0 : index
    %147 = vector.load %arg6[%c0_58, %c0_59] : memref<8x1xf32, #tpu.memory_space<vmem>>, vector<8x1xf32>
    %148 = vector.shape_cast %147 : vector<8x1xf32> to vector<1x8x1xf32>
    %149 = vector.broadcast %148 : vector<1x8x1xf32> to vector<2x8x16xf32>
    %150 = arith.addf %146, %149 : vector<2x8x16xf32>
    %cst_60 = arith.constant dense<0.000000e+00> : vector<2x8xf32>
    %151 = vector.multi_reduction <add>, %150, %cst_60 [2] : vector<2x8x16xf32> to vector<2x8xf32>
    %152 = vector.shape_cast %151 : vector<2x8xf32> to vector<2x8x1xf32>
    %cst_61 = arith.constant dense<0.000000e+00> : vector<8x1xf32>
    %153 = vector.multi_reduction <add>, %152, %cst_61 [0] : vector<2x8x1xf32> to vector<8x1xf32>
    %154 = vector.shape_cast %153 : vector<8x1xf32> to vector<1x8x1xf32>
    %cst_62 = arith.constant 3.125000e-02 : f32
    %155 = vector.broadcast %cst_62 : f32 to vector<1x8x1xf32>
    %156 = arith.mulf %154, %155 : vector<1x8x1xf32>
    %157 = arith.mulf %150, %150 : vector<2x8x16xf32>
    %cst_63 = arith.constant dense<0.000000e+00> : vector<2x8xf32>
    %158 = vector.multi_reduction <add>, %157, %cst_63 [2] : vector<2x8x16xf32> to vector<2x8xf32>
    %159 = vector.shape_cast %158 : vector<2x8xf32> to vector<2x8x1xf32>
    %cst_64 = arith.constant dense<0.000000e+00> : vector<8x1xf32>
    %160 = vector.multi_reduction <add>, %159, %cst_64 [0] : vector<2x8x1xf32> to vector<8x1xf32>
    %161 = vector.shape_cast %160 : vector<8x1xf32> to vector<1x8x1xf32>
    %cst_65 = arith.constant 3.125000e-02 : f32
    %162 = vector.broadcast %cst_65 : f32 to vector<1x8x1xf32>
    %163 = arith.mulf %161, %162 : vector<1x8x1xf32>
    %164 = arith.mulf %156, %156 : vector<1x8x1xf32>
    %165 = arith.subf %163, %164 : vector<1x8x1xf32>
    %cst_66 = arith.constant 0.000000e+00 : f32
    %166 = vector.broadcast %cst_66 : f32 to vector<1x8x1xf32>
    %167 = arith.maximumf %165, %166 : vector<1x8x1xf32>
    %c0_67 = arith.constant 0 : index
    %c0_68 = arith.constant 0 : index
    %168 = vector.load %arg13[%c0_67, %c0_68] : memref<8x1xf32, #tpu.memory_space<vmem>>, vector<8x1xf32>
    %cst_69 = arith.constant 9.99999974E-6 : f32
    %169 = vector.broadcast %cst_69 : f32 to vector<1x8x1xf32>
    %170 = arith.addf %167, %169 : vector<1x8x1xf32>
    %171 = math.rsqrt %170 : vector<1x8x1xf32>
    %172 = vector.shape_cast %168 : vector<8x1xf32> to vector<1x8x1xf32>
    %173 = arith.mulf %172, %171 : vector<1x8x1xf32>
    %c0_70 = arith.constant 0 : index
    %c0_71 = arith.constant 0 : index
    %174 = vector.load %arg14[%c0_70, %c0_71] : memref<8x1xf32, #tpu.memory_space<vmem>>, vector<8x1xf32>
    %175 = arith.mulf %156, %173 : vector<1x8x1xf32>
    %176 = vector.shape_cast %174 : vector<8x1xf32> to vector<1x8x1xf32>
    %177 = arith.subf %176, %175 : vector<1x8x1xf32>
    %178 = vector.broadcast %173 : vector<1x8x1xf32> to vector<2x8x16xf32>
    %179 = arith.mulf %150, %178 : vector<2x8x16xf32>
    %180 = vector.broadcast %177 : vector<1x8x1xf32> to vector<2x8x16xf32>
    %181 = arith.addf %179, %180 : vector<2x8x16xf32>
    %c0_72 = arith.constant 0 : index
    %c0_73 = arith.constant 0 : index
    %182 = vector.load %arg7[%c0_72, %c0_73] : memref<8x8xbf16, #tpu.memory_space<vmem>>, vector<8x8xbf16>
    %183 = vector.shape_cast %182 : vector<8x8xbf16> to vector<1x8x8xbf16>
    %184 = vector.broadcast %183 : vector<1x8x8xbf16> to vector<2x8x8xbf16>
    %185 = arith.truncf %0 : vector<2x8x16xf32> to vector<2x8x16xbf16>
    "tpu.trace_start"() <{level = 10 : i32, message = "nok,nkl->nol"}> : () -> ()
    %cst_74 = arith.constant dense<0.000000e+00> : vector<2x8x16xf32>
    %186 = tpu.matmul %184, %185, %cst_74 {dimension_numbers = #tpu.dot_dimension_numbers<[2], [1], [1], [2], [0, 0, 0, 1, 1, 2], [0], [0]>} : vector<2x8x8xbf16>, vector<2x8x16xbf16>, vector<2x8x16xf32> -> vector<2x8x16xf32>
    "tpu.trace_stop"() : () -> ()
    %c0_75 = arith.constant 0 : index
    %c0_76 = arith.constant 0 : index
    %187 = vector.load %arg8[%c0_75, %c0_76] : memref<8x1xf32, #tpu.memory_space<vmem>>, vector<8x1xf32>
    %188 = vector.shape_cast %187 : vector<8x1xf32> to vector<1x8x1xf32>
    %189 = vector.broadcast %188 : vector<1x8x1xf32> to vector<2x8x16xf32>
    %190 = arith.addf %186, %189 : vector<2x8x16xf32>
    %cst_77 = arith.constant dense<0.000000e+00> : vector<2x8xf32>
    %191 = vector.multi_reduction <add>, %190, %cst_77 [2] : vector<2x8x16xf32> to vector<2x8xf32>
    %192 = vector.shape_cast %191 : vector<2x8xf32> to vector<2x8x1xf32>
    %cst_78 = arith.constant dense<0.000000e+00> : vector<8x1xf32>
    %193 = vector.multi_reduction <add>, %192, %cst_78 [0] : vector<2x8x1xf32> to vector<8x1xf32>
    %194 = vector.shape_cast %193 : vector<8x1xf32> to vector<1x8x1xf32>
    %cst_79 = arith.constant 3.125000e-02 : f32
    %195 = vector.broadcast %cst_79 : f32 to vector<1x8x1xf32>
    %196 = arith.mulf %194, %195 : vector<1x8x1xf32>
    %197 = arith.mulf %190, %190 : vector<2x8x16xf32>
    %cst_80 = arith.constant dense<0.000000e+00> : vector<2x8xf32>
    %198 = vector.multi_reduction <add>, %197, %cst_80 [2] : vector<2x8x16xf32> to vector<2x8xf32>
    %199 = vector.shape_cast %198 : vector<2x8xf32> to vector<2x8x1xf32>
    %cst_81 = arith.constant dense<0.000000e+00> : vector<8x1xf32>
    %200 = vector.multi_reduction <add>, %199, %cst_81 [0] : vector<2x8x1xf32> to vector<8x1xf32>
    %201 = vector.shape_cast %200 : vector<8x1xf32> to vector<1x8x1xf32>
    %cst_82 = arith.constant 3.125000e-02 : f32
    %202 = vector.broadcast %cst_82 : f32 to vector<1x8x1xf32>
    %203 = arith.mulf %201, %202 : vector<1x8x1xf32>
    %204 = arith.mulf %196, %196 : vector<1x8x1xf32>
    %205 = arith.subf %203, %204 : vector<1x8x1xf32>
    %cst_83 = arith.constant 0.000000e+00 : f32
    %206 = vector.broadcast %cst_83 : f32 to vector<1x8x1xf32>
    %207 = arith.maximumf %205, %206 : vector<1x8x1xf32>
    %c0_84 = arith.constant 0 : index
    %c0_85 = arith.constant 0 : index
    %208 = vector.load %arg9[%c0_84, %c0_85] : memref<8x1xf32, #tpu.memory_space<vmem>>, vector<8x1xf32>
    %cst_86 = arith.constant 9.99999974E-6 : f32
    %209 = vector.broadcast %cst_86 : f32 to vector<1x8x1xf32>
    %210 = arith.addf %207, %209 : vector<1x8x1xf32>
    %211 = math.rsqrt %210 : vector<1x8x1xf32>
    %212 = vector.shape_cast %208 : vector<8x1xf32> to vector<1x8x1xf32>
    %213 = arith.mulf %212, %211 : vector<1x8x1xf32>
    %c0_87 = arith.constant 0 : index
    %c0_88 = arith.constant 0 : index
    %214 = vector.load %arg10[%c0_87, %c0_88] : memref<8x1xf32, #tpu.memory_space<vmem>>, vector<8x1xf32>
    %215 = arith.mulf %196, %213 : vector<1x8x1xf32>
    %216 = vector.shape_cast %214 : vector<8x1xf32> to vector<1x8x1xf32>
    %217 = arith.subf %216, %215 : vector<1x8x1xf32>
    %218 = vector.broadcast %213 : vector<1x8x1xf32> to vector<2x8x16xf32>
    %219 = arith.mulf %190, %218 : vector<2x8x16xf32>
    %220 = vector.broadcast %217 : vector<1x8x1xf32> to vector<2x8x16xf32>
    %221 = arith.addf %219, %220 : vector<2x8x16xf32>
    %222 = arith.addf %181, %221 : vector<2x8x16xf32>
    %cst_89 = arith.constant 0.000000e+00 : f32
    %223 = vector.broadcast %cst_89 : f32 to vector<2x8x16xf32>
    %224 = arith.maximumf %222, %223 : vector<2x8x16xf32>
    %c0_90 = arith.constant 0 : index
    %c0_91 = arith.constant 0 : index
    %c0_92 = arith.constant 0 : index
    %225 = vector.load %arg15[%c0_90, %c0_91, %c0_92] : memref<2x8x16xf32, #tpu.memory_space<vmem>>, vector<2x8x16xf32>
    tpu.vector_store %arg15[%c0_90, %c0_91, %c0_92], %224 {strides = array<i32>} : memref<2x8x16xf32, #tpu.memory_space<vmem>>, vector<2x8x16xf32>,
    return
  }
}

</mosaic_0001>

<llo_original>
// kernel: tpu_custom_call.1
$region0: #{tpu_custom_call.1}
  #allocation0 [shape = 'u32[]', space=smem, size = 0x4, offset = 0x4, fixed_abs, tag = 'smem constant byte address 0x4 - core index']
  #allocation1 [shape = 'u32[144,128]{1,0:T(1,128)}', space=vmem, size = 0x12000, scoped, tag = 'internal scratch']
  %s0 = inlined_call_operand.vmem [shape: f32[2,8,16], index: 0, kind: input, shape index: {}]
  %s1 = inlined_call_operand.vmem [shape: bf16[8,64], index: 1, kind: input, shape index: {}]
  %s2 = inlined_call_operand.vmem [shape: f32[8,1], index: 2, kind: input, shape index: {}]
  %s3 = inlined_call_operand.vmem [shape: bf16[8,40], index: 3, kind: input, shape index: {}]
  %s4 = inlined_call_operand.vmem [shape: f32[8,1], index: 4, kind: input, shape index: {}]
  %s5 = inlined_call_operand.vmem [shape: bf16[8,64], index: 5, kind: input, shape index: {}]
  %s6 = inlined_call_operand.vmem [shape: f32[8,1], index: 6, kind: input, shape index: {}]
  %s7 = inlined_call_operand.vmem [shape: bf16[8,8], index: 7, kind: input, shape index: {}]
  %s8 = inlined_call_operand.vmem [shape: f32[8,1], index: 8, kind: input, shape index: {}]
  %s9 = inlined_call_operand.vmem [shape: f32[8,1], index: 9, kind: input, shape index: {}]
  %s10 = inlined_call_operand.vmem [shape: f32[8,1], index: 10, kind: input, shape index: {}]
  %s11 = inlined_call_operand.vmem [shape: f32[8,1], index: 11, kind: input, shape index: {}]
  %s12 = inlined_call_operand.vmem [shape: f32[8,1], index: 12, kind: input, shape index: {}]
  %s13 = inlined_call_operand.vmem [shape: f32[8,1], index: 13, kind: input, shape index: {}]
  %s14 = inlined_call_operand.vmem [shape: f32[8,1], index: 14, kind: input, shape index: {}]
  %s15 = inlined_call_operand.hbm [shape: f32[2,8,16], index: 15, kind: output, shape index: {}]
  %s16 = sld [smem:[#allocation0]]
  $region70: #{tpu_custom_call.1} parent=0
    _
  %s18 = ssub.s32 1, %s16
  %s19 = scalar_select 0, %s18, %s16
  $region1: #{tpu_custom_call.1} parent=0
    #allocation2 [shape = 'u8[8192]{0}', space=vmem, size = 0x2000, scoped, tag = 'output window, operand 0, single buffered']
    #allocation3 [shape = 's32[1]{0}', space=sflag, size = 0x4, scoped, tag = 'scoped memory for tpu_custom_call.1']
    %20 = vsyncpa [#allocation3], 0
    // Predicated region
    $region2: #{tpu_custom_call.1} parent=1 // pred_check
      _
    $region3: #{tpu_custom_call.1} parent=1 // pred_check_branch
      %22 = sbr.rel (0) target = $region5
    $region4: #{tpu_custom_call.1} parent=1 // pred_region
      _
    $region5: #{tpu_custom_call.1} parent=1 // pred_fallthru
      _
    // Predicated region
    $region6: #{tpu_custom_call.1} parent=1 // pred_check
      _
    $region7: #{tpu_custom_call.1} parent=1 // pred_check_branch
      %24 = sbr.rel (0) target = $region9
    $region8: #{tpu_custom_call.1} parent=1 // pred_region
      _
    $region9: #{tpu_custom_call.1} parent=1 // pred_fallthru
      _
    // Predicated region
    $region10: #{tpu_custom_call.1} parent=1 // pred_check
      _
    $region11: #{tpu_custom_call.1} parent=1 // pred_check_branch
      %26 = sbr.rel (0) target = $region13
    $region12: #{tpu_custom_call.1} parent=1 // pred_region
      _
    $region13: #{tpu_custom_call.1} parent=1 // pred_fallthru
      _
    // Predicated region
    $region14: #{tpu_custom_call.1} parent=1 // pred_check
      _
    $region15: #{tpu_custom_call.1} parent=1 // pred_check_branch
      %28 = sbr.rel (0) target = $region17
    $region16: #{tpu_custom_call.1} parent=1 // pred_region
      _
    $region17: #{tpu_custom_call.1} parent=1 // pred_fallthru
      _
    // Predicated region
    $region18: #{tpu_custom_call.1} parent=1 // pred_check
      _
    $region19: #{tpu_custom_call.1} parent=1 // pred_check_branch
      %30 = sbr.rel (0) target = $region21
    $region20: #{tpu_custom_call.1} parent=1 // pred_region
      _
    $region21: #{tpu_custom_call.1} parent=1 // pred_fallthru
      _
    // Predicated region
    $region22: #{tpu_custom_call.1} parent=1 // pred_check
      _
    $region23: #{tpu_custom_call.1} parent=1 // pred_check_branch
      %32 = sbr.rel (0) target = $region25
    $region24: #{tpu_custom_call.1} parent=1 // pred_region
      _
    $region25: #{tpu_custom_call.1} parent=1 // pred_fallthru
      _
    // Predicated region
    $region26: #{tpu_custom_call.1} parent=1 // pred_check
      _
    $region27: #{tpu_custom_call.1} parent=1 // pred_check_branch
      %34 = sbr.rel (0) target = $region29
    $region28: #{tpu_custom_call.1} parent=1 // pred_region
      _
    $region29: #{tpu_custom_call.1} parent=1 // pred_fallthru
      _
    // Predicated region
    $region30: #{tpu_custom_call.1} parent=1 // pred_check
      _
    $region31: #{tpu_custom_call.1} parent=1 // pred_check_branch
      %36 = sbr.rel (0) target = $region33
    $region32: #{tpu_custom_call.1} parent=1 // pred_region
      _
    $region33: #{tpu_custom_call.1} parent=1 // pred_fallthru
      _
    // Predicated region
    $region34: #{tpu_custom_call.1} parent=1 // pred_check
      _
    $region35: #{tpu_custom_call.1} parent=1 // pred_check_branch
      %38 = sbr.rel (0) target = $region37
    $region36: #{tpu_custom_call.1} parent=1 // pred_region
      _
    $region37: #{tpu_custom_call.1} parent=1 // pred_fallthru
      _
    // Predicated region
    $region38: #{tpu_custom_call.1} parent=1 // pred_check
      _
    $region39: #{tpu_custom_call.1} parent=1 // pred_check_branch
      %40 = sbr.rel (0) target = $region41
    $region40: #{tpu_custom_call.1} parent=1 // pred_region
      _
    $region41: #{tpu_custom_call.1} parent=1 // pred_fallthru
      _
    // Predicated region
    $region42: #{tpu_custom_call.1} parent=1 // pred_check
      _
    $region43: #{tpu_custom_call.1} parent=1 // pred_check_branch
      %42 = sbr.rel (0) target = $region45
    $region44: #{tpu_custom_call.1} parent=1 // pred_region
      _
    $region45: #{tpu_custom_call.1} parent=1 // pred_fallthru
      _
    // Predicated region
    $region46: #{tpu_custom_call.1} parent=1 // pred_check
      _
    $region47: #{tpu_custom_call.1} parent=1 // pred_check_branch
      %44 = sbr.rel (0) target = $region49
    $region48: #{tpu_custom_call.1} parent=1 // pred_region
      _
    $region49: #{tpu_custom_call.1} parent=1 // pred_fallthru
      _
    // Predicated region
    $region50: #{tpu_custom_call.1} parent=1 // pred_check
      _
    $region51: #{tpu_custom_call.1} parent=1 // pred_check_branch
      %46 = sbr.rel (0) target = $region53
    $region52: #{tpu_custom_call.1} parent=1 // pred_region
      _
    $region53: #{tpu_custom_call.1} parent=1 // pred_fallthru
      _
    // Predicated region
    $region54: #{tpu_custom_call.1} parent=1 // pred_check
      _
    $region55: #{tpu_custom_call.1} parent=1 // pred_check_branch
      %48 = sbr.rel (0) target = $region57
    $region56: #{tpu_custom_call.1} parent=1 // pred_region
      _
    $region57: #{tpu_custom_call.1} parent=1 // pred_fallthru
      _
    // Predicated region
    $region58: #{tpu_custom_call.1} parent=1 // pred_check
      _
    $region59: #{tpu_custom_call.1} parent=1 // pred_check_branch
      %50 = sbr.rel (0) target = $region61
    $region60: #{tpu_custom_call.1} parent=1 // pred_region
      _
    $region61: #{tpu_custom_call.1} parent=1 // pred_fallthru
      _
    %v52 = vld [vmem:[%s0] sm:$0xff]
    %v53 = vld [vmem:[%s0 + $0x8] sm:$0xff]
    %56 = vrot.lane.b32.xlu0 %v52, 3
    %v57 = vpop.permute.xlu0 %56
    %58 = vrot.lane.b32.xlu0 %v53, 3
    %v59 = vpop.permute.xlu0 %58
    %vm62 = vcmask 23552
    %v63 = vsel %vm62, 0.0, %v57
    %v64 = vsel %vm62, 0.0, %v59
    %65 = vrot.lane.b32.xlu0 %v52, 2
    %v66 = vpop.permute.xlu0 %65
    %67 = vrot.lane.b32.xlu0 %v53, 2
    %v68 = vpop.permute.xlu0 %67
    %vm71 = vcmask 15360
    %v72 = vsel %vm71, 0.0, %v66
    %v73 = vsel %vm71, 0.0, %v68
    %74 = vrot.lane.b32.xlu0 %v52, 1
    %v75 = vpop.permute.xlu0 %74
    %76 = vrot.lane.b32.xlu0 %v53, 1
    %v77 = vpop.permute.xlu0 %76
    %vm80 = vcmask 7168
    %v81 = vsel %vm80, 0.0, %v75
    %v82 = vsel %vm80, 0.0, %v77
    %83 = vrot.lane.b32.xlu0 %v52, 127
    %v84 = vpop.permute.xlu0 %83
    %85 = vrot.lane.b32.xlu0 %v53, 127
    %v86 = vpop.permute.xlu0 %85
    %vm89 = vcmask 121856
    %v90 = vsel %vm89, %v84, 0.0
    %v91 = vsel %vm89, %v86, 0.0
    %92 = vrot.lane.b32.xlu0 %v52, 126
    %v93 = vpop.permute.xlu0 %92
    %94 = vrot.lane.b32.xlu0 %v53, 126
    %v95 = vpop.permute.xlu0 %94
    %vm98 = vcmask 113664
    %v99 = vsel %vm98, %v93, 0.0
    %v100 = vsel %vm98, %v95, 0.0
    %101 = vrot.lane.b32.xlu0 %v52, 125
    %v102 = vpop.permute.xlu0 %101
    %103 = vrot.lane.b32.xlu0 %v53, 125
    %v104 = vpop.permute.xlu0 %103
    %vm107 = vcmask 105472
    %v108 = vsel %vm107, %v102, 0.0
    %v109 = vsel %vm107, %v104, 0.0
    %110 = vrot.lane.b32.xlu0 %v52, 124
    %v111 = vpop.permute.xlu0 %110
    %112 = vrot.lane.b32.xlu0 %v53, 124
    %v113 = vpop.permute.xlu0 %112
    %vm116 = vcmask 97280
    %v117 = vsel %vm116, %v111, 0.0
    %v118 = vsel %vm116, %v113, 0.0
    %v119 = vld [vmem:[%s1] sm:$0xf]
    %v120 = vpack.c.bf16 %v72, %v63
    %v121 = vpack.c.bf16 %v52, %v81
    %v122 = vpack.c.bf16 %v99, %v90
    %v123 = vpack.c.bf16 %v117, %v108
    %v124 = vpack.c.bf16 %v73, %v64
    %v125 = vpack.c.bf16 %v53, %v82
    %v126 = vpack.c.bf16 %v100, %v91
    %v127 = vpack.c.bf16 %v118, %v109
    %v128 = vld [vmem:[%s2] sm:$0xff]
    %130 = vset.pattern.permute.xlu0 0
    %131 = vperm.xlu0 %130, %v128
    %v132 = vpop.permute.xlu0 %131
    %vm134 = vcmask 523264
    %v136 = vsel %vm134, %v119, 0
    %138 = vmatprep.subr.bf16.mxu0 0
    %139 = vmatpush1.bf16.msra.mxu0 %v120
    %140 = vmatprep.subr.bf16.mxu0 0
    %141 = vmatpush1.bf16.msra.mxu0 %v121
    %142 = vmatprep.subr.bf16.mxu0 0
    %143 = vmatpush1.bf16.msra.mxu0 %v122
    %144 = vmatprep.subr.bf16.mxu0 0
    %145 = vmatpush1.bf16.msra.mxu0 %v123
    %146 = vmatprep.subr.bf16.mxu0 0
    %147 = vmatpush1.bf16.msra.mxu0 0
    %148 = vmatprep.subr.bf16.mxu0 0
    %149 = vmatpush1.bf16.msra.mxu0 0
    %150 = vmatprep.subr.bf16.mxu0 0
    %151 = vmatpush1.bf16.msra.mxu0 0
    %152 = vmatprep.subr.bf16.mxu0 0
    %153 = vmatpush1.bf16.msra.mxu0 0
    %154 = vmatprep.subr.bf16.mxu0 0
    %155 = vmatpush1.bf16.msra.mxu0 0
    %156 = vmatprep.subr.bf16.mxu0 0
    %157 = vmatpush1.bf16.msra.mxu0 0
    %158 = vmatprep.subr.bf16.mxu0 0
    %159 = vmatpush1.bf16.msra.mxu0 0
    %160 = vmatprep.subr.bf16.mxu0 0
    %161 = vmatpush1.bf16.msra.mxu0 0
    %162 = vmatprep.subr.bf16.mxu0 0
    %163 = vmatpush1.bf16.msra.mxu0 0
    %164 = vmatprep.subr.bf16.mxu0 0
    %165 = vmatpush1.bf16.msra.mxu0 0
    %166 = vmatprep.subr.bf16.mxu0 0
    %167 = vmatpush1.bf16.msra.mxu0 0
    %168 = vmatprep.subr.bf16.mxu0 0
    %169 = vmatpush1.bf16.msra.mxu0 0
    %170 = vmatprep.mubr.bf16.mxu0 0
    %171 = vmatmul.mubr.bf16.gmra.mrb[0].mxu0 %v136
    %v172 = vpop.f32.mrb[0].mxu0
    %v173 = vadd.f32 %v132, %v172
    %v174 = vpop.f32.mrb[0].mxu0
    %v175 = vpop.f32.mrb[0].mxu0
    %v176 = vpop.f32.mrb[0].mxu0
    %177 = vdwg.mxu0
    %178 = vmatprep.subr.bf16.mxu0 0
    %179 = vmatpush1.bf16.msra.mxu0 %v124
    %180 = vmatprep.subr.bf16.mxu0 0
    %181 = vmatpush1.bf16.msra.mxu0 %v125
    %182 = vmatprep.subr.bf16.mxu0 0
    %183 = vmatpush1.bf16.msra.mxu0 %v126
    %184 = vmatprep.subr.bf16.mxu0 0
    %185 = vmatpush1.bf16.msra.mxu0 %v127
    %186 = vmatprep.subr.bf16.mxu0 0
    %187 = vmatpush1.bf16.msra.mxu0 0
    %188 = vmatprep.subr.bf16.mxu0 0
    %189 = vmatpush1.bf16.msra.mxu0 0
    %190 = vmatprep.subr.bf16.mxu0 0
    %191 = vmatpush1.bf16.msra.mxu0 0
    %192 = vmatprep.subr.bf16.mxu0 0
    %193 = vmatpush1.bf16.msra.mxu0 0
    %194 = vmatprep.subr.bf16.mxu0 0
    %195 = vmatpush1.bf16.msra.mxu0 0
    %196 = vmatprep.subr.bf16.mxu0 0
    %197 = vmatpush1.bf16.msra.mxu0 0
    %198 = vmatprep.subr.bf16.mxu0 0
    %199 = vmatpush1.bf16.msra.mxu0 0
    %200 = vmatprep.subr.bf16.mxu0 0
    %201 = vmatpush1.bf16.msra.mxu0 0
    %202 = vmatprep.subr.bf16.mxu0 0
    %203 = vmatpush1.bf16.msra.mxu0 0
    %204 = vmatprep.subr.bf16.mxu0 0
    %205 = vmatpush1.bf16.msra.mxu0 0
    %206 = vmatprep.subr.bf16.mxu0 0
    %207 = vmatpush1.bf16.msra.mxu0 0
    %208 = vmatprep.subr.bf16.mxu0 0
    %209 = vmatpush1.bf16.msra.mxu0 0
    %210 = vmatprep.mubr.bf16.mxu0 0
    %211 = vmatmul.mubr.bf16.gmra.mrb[0].mxu0 %v136
    %v212 = vpop.f32.mrb[0].mxu0
    %v213 = vadd.f32 %v132, %v212
    %v214 = vpop.f32.mrb[0].mxu0
    %v215 = vpop.f32.mrb[0].mxu0
    %v216 = vpop.f32.mrb[0].mxu0
    %217 = vdwg.mxu0
    %vm218 = vcmask 130048
    %v219 = vsel %vm218, %v173, 0.0
    %220 = vadd.xlane.f32.xlu0 %v219
    %v221 = vpop.xlane.xlu0 %220
    %v222 = vsel %vm218, %v213, 0.0
    %223 = vadd.xlane.f32.xlu0 %v222
    %v224 = vpop.xlane.xlu0 %223
    %v225 = vadd.f32 %v221, %v224
    %v226 = vmul.f32 %v225, 0.03125
    %v227 = vmul.f32 %v173, %v173
    %v228 = vmul.f32 %v213, %v213
    %v229 = vsel %vm218, %v227, 0.0
    %230 = vadd.xlane.f32.xlu0 %v229
    %v231 = vpop.xlane.xlu0 %230
    %v232 = vsel %vm218, %v228, 0.0
    %233 = vadd.xlane.f32.xlu0 %v232
    %v234 = vpop.xlane.xlu0 %233
    %v235 = vadd.f32 %v231, %v234
    %v236 = vmul.f32 %v235, 0.03125
    %v237 = vmul.f32 %v226, %v226
    %v238 = vsub.f32 %v236, %v237
    %v239 = vmax.f32 %v238, 0.0
    %v240 = vld [vmem:[%s9] sm:$0xff]
    %v241 = vadd.f32 %v239, 1e-05
    %v242 = vrsqrt.pop %v241
    %v243 = vmul.f32 %v240, %v242
    %v244 = vld [vmem:[%s10] sm:$0xff]
    %v245 = vmul.f32 %v226, %v243
    %v246 = vsub.f32 %v244, %v245
    %248 = vset.pattern.permute.xlu0 0
    %249 = vperm.xlu0 %248, %v243
    %v250 = vpop.permute.xlu0 %249
    %v252 = vmul.f32 %v173, %v250
    %v253 = vmul.f32 %v213, %v250
    %255 = vset.pattern.permute.xlu0 0
    %256 = vperm.xlu0 %255, %v246
    %v257 = vpop.permute.xlu0 %256
    %v259 = vadd.f32 %v252, %v257
    %v260 = vadd.f32 %v253, %v257
    %v261 = vmax.f32 %v259, 0.0
    %v262 = vmax.f32 %v260, 0.0
    %265 = vrot.lane.b32.xlu0 %v261, 2
    %v266 = vpop.permute.xlu0 %265
    %267 = vrot.lane.b32.xlu0 %v262, 2
    %v268 = vpop.permute.xlu0 %267
    %v271 = vsel %vm71, 0.0, %v266
    %v272 = vsel %vm71, 0.0, %v268
    %273 = vrot.lane.b32.xlu0 %v261, 1
    %v274 = vpop.permute.xlu0 %273
    %275 = vrot.lane.b32.xlu0 %v262, 1
    %v276 = vpop.permute.xlu0 %275
    %v279 = vsel %vm80, 0.0, %v274
    %v280 = vsel %vm80, 0.0, %v276
    %281 = vrot.lane.b32.xlu0 %v261, 127
    %v282 = vpop.permute.xlu0 %281
    %283 = vrot.lane.b32.xlu0 %v262, 127
    %v284 = vpop.permute.xlu0 %283
    %v287 = vsel %vm89, %v282, 0.0
    %v288 = vsel %vm89, %v284, 0.0
    %289 = vrot.lane.b32.xlu0 %v261, 126
    %v290 = vpop.permute.xlu0 %289
    %291 = vrot.lane.b32.xlu0 %v262, 126
    %v292 = vpop.permute.xlu0 %291
    %v295 = vsel %vm98, %v290, 0.0
    %v296 = vsel %vm98, %v292, 0.0
    %v297 = vld [vmem:[%s3] sm:$0xf]
    %v298 = vpack.c.bf16 %v279, %v271
    %v299 = vpack.c.bf16 %v287, %v261
    %v300 = vpack.c.bf16 %v295, %v295
    %v301 = vpack.c.bf16 %v280, %v272
    %v302 = vpack.c.bf16 %v288, %v262
    %v303 = vpack.c.bf16 %v296, %v296
    %v304 = vld [vmem:[%s4] sm:$0xff]
    %306 = vset.pattern.permute.xlu0 0
    %307 = vperm.xlu0 %306, %v304
    %v308 = vpop.permute.xlu0 %307
    %vm310 = vcmask 326656
    %v312 = vsel %vm310, %v297, 0
    %vm314 = vcmask 1043456
    %v316 = vsel %vm314, %v300, 0
    %318 = vmatprep.subr.bf16.mxu0 0
    %319 = vmatpush1.bf16.msra.mxu0 %v298
    %320 = vmatprep.subr.bf16.mxu0 0
    %321 = vmatpush1.bf16.msra.mxu0 %v299
    %322 = vmatprep.subr.bf16.mxu0 0
    %323 = vmatpush1.bf16.msra.mxu0 %v316
    %324 = vmatprep.subr.bf16.mxu0 0
    %325 = vmatpush1.bf16.msra.mxu0 0
    %326 = vmatprep.subr.bf16.mxu0 0
    %327 = vmatpush1.bf16.msra.mxu0 0
    %328 = vmatprep.subr.bf16.mxu0 0
    %329 = vmatpush1.bf16.msra.mxu0 0
    %330 = vmatprep.subr.bf16.mxu0 0
    %331 = vmatpush1.bf16.msra.mxu0 0
    %332 = vmatprep.subr.bf16.mxu0 0
    %333 = vmatpush1.bf16.msra.mxu0 0
    %334 = vmatprep.subr.bf16.mxu0 0
    %335 = vmatpush1.bf16.msra.mxu0 0
    %336 = vmatprep.subr.bf16.mxu0 0
    %337 = vmatpush1.bf16.msra.mxu0 0
    %338 = vmatprep.subr.bf16.mxu0 0
    %339 = vmatpush1.bf16.msra.mxu0 0
    %340 = vmatprep.subr.bf16.mxu0 0
    %341 = vmatpush1.bf16.msra.mxu0 0
    %342 = vmatprep.subr.bf16.mxu0 0
    %343 = vmatpush1.bf16.msra.mxu0 0
    %344 = vmatprep.subr.bf16.mxu0 0
    %345 = vmatpush1.bf16.msra.mxu0 0
    %346 = vmatprep.subr.bf16.mxu0 0
    %347 = vmatpush1.bf16.msra.mxu0 0
    %348 = vmatprep.subr.bf16.mxu0 0
    %349 = vmatpush1.bf16.msra.mxu0 0
    %350 = vmatprep.mubr.bf16.mxu0 0
    %351 = vmatmul.mubr.bf16.gmra.mrb[0].mxu0 %v312
    %v352 = vpop.f32.mrb[0].mxu0
    %v353 = vadd.f32 %v308, %v352
    %v354 = vpop.f32.mrb[0].mxu0
    %v355 = vpop.f32.mrb[0].mxu0
    %v356 = vpop.f32.mrb[0].mxu0
    %357 = vdwg.mxu0
    %v359 = vsel %vm314, %v303, 0
    %361 = vmatprep.subr.bf16.mxu0 0
    %362 = vmatpush1.bf16.msra.mxu0 %v301
    %363 = vmatprep.subr.bf16.mxu0 0
    %364 = vmatpush1.bf16.msra.mxu0 %v302
    %365 = vmatprep.subr.bf16.mxu0 0
    %366 = vmatpush1.bf16.msra.mxu0 %v359
    %367 = vmatprep.subr.bf16.mxu0 0
    %368 = vmatpush1.bf16.msra.mxu0 0
    %369 = vmatprep.subr.bf16.mxu0 0
    %370 = vmatpush1.bf16.msra.mxu0 0
    %371 = vmatprep.subr.bf16.mxu0 0
    %372 = vmatpush1.bf16.msra.mxu0 0
    %373 = vmatprep.subr.bf16.mxu0 0
    %374 = vmatpush1.bf16.msra.mxu0 0
    %375 = vmatprep.subr.bf16.mxu0 0
    %376 = vmatpush1.bf16.msra.mxu0 0
    %377 = vmatprep.subr.bf16.mxu0 0
    %378 = vmatpush1.bf16.msra.mxu0 0
    %379 = vmatprep.subr.bf16.mxu0 0
    %380 = vmatpush1.bf16.msra.mxu0 0
    %381 = vmatprep.subr.bf16.mxu0 0
    %382 = vmatpush1.bf16.msra.mxu0 0
    %383 = vmatprep.subr.bf16.mxu0 0
    %384 = vmatpush1.bf16.msra.mxu0 0
    %385 = vmatprep.subr.bf16.mxu0 0
    %386 = vmatpush1.bf16.msra.mxu0 0
    %387 = vmatprep.subr.bf16.mxu0 0
    %388 = vmatpush1.bf16.msra.mxu0 0
    %389 = vmatprep.subr.bf16.mxu0 0
    %390 = vmatpush1.bf16.msra.mxu0 0
    %391 = vmatprep.subr.bf16.mxu0 0
    %392 = vmatpush1.bf16.msra.mxu0 0
    %393 = vmatprep.mubr.bf16.mxu0 0
    %394 = vmatmul.mubr.bf16.gmra.mrb[0].mxu0 %v312
    %v395 = vpop.f32.mrb[0].mxu0
    %v396 = vadd.f32 %v308, %v395
    %v397 = vpop.f32.mrb[0].mxu0
    %v398 = vpop.f32.mrb[0].mxu0
    %v399 = vpop.f32.mrb[0].mxu0
    %400 = vdwg.mxu0
    %v401 = vsel %vm218, %v353, 0.0
    %402 = vadd.xlane.f32.xlu0 %v401
    %v403 = vpop.xlane.xlu0 %402
    %v404 = vsel %vm218, %v396, 0.0
    %405 = vadd.xlane.f32.xlu0 %v404
    %v406 = vpop.xlane.xlu0 %405
    %v407 = vadd.f32 %v403, %v406
    %v408 = vmul.f32 %v407, 0.03125
    %v409 = vmul.f32 %v353, %v353
    %v410 = vmul.f32 %v396, %v396
    %v411 = vsel %vm218, %v409, 0.0
    %412 = vadd.xlane.f32.xlu0 %v411
    %v413 = vpop.xlane.xlu0 %412
    %v414 = vsel %vm218, %v410, 0.0
    %415 = vadd.xlane.f32.xlu0 %v414
    %v416 = vpop.xlane.xlu0 %415
    %v417 = vadd.f32 %v413, %v416
    %v418 = vmul.f32 %v417, 0.03125
    %v419 = vmul.f32 %v408, %v408
    %v420 = vsub.f32 %v418, %v419
    %v421 = vmax.f32 %v420, 0.0
    %v422 = vld [vmem:[%s11] sm:$0xff]
    %v423 = vadd.f32 %v421, 1e-05
    %v424 = vrsqrt.pop %v423
    %v425 = vmul.f32 %v422, %v424
    %v426 = vld [vmem:[%s12] sm:$0xff]
    %v427 = vmul.f32 %v408, %v425
    %v428 = vsub.f32 %v426, %v427
    %430 = vset.pattern.permute.xlu0 0
    %431 = vperm.xlu0 %430, %v425
    %v432 = vpop.permute.xlu0 %431
    %v434 = vmul.f32 %v353, %v432
    %v435 = vmul.f32 %v396, %v432
    %437 = vset.pattern.permute.xlu0 0
    %438 = vperm.xlu0 %437, %v428
    %v439 = vpop.permute.xlu0 %438
    %v441 = vadd.f32 %v434, %v439
    %v442 = vadd.f32 %v435, %v439
    %v443 = vmax.f32 %v441, 0.0
    %v444 = vmax.f32 %v442, 0.0
    %447 = vrot.lane.b32.xlu0 %v443, 3
    %v448 = vpop.permute.xlu0 %447
    %449 = vrot.lane.b32.xlu0 %v444, 3
    %v450 = vpop.permute.xlu0 %449
    %v453 = vsel %vm62, 0.0, %v448
    %v454 = vsel %vm62, 0.0, %v450
    %455 = vrot.lane.b32.xlu0 %v443, 2
    %v456 = vpop.permute.xlu0 %455
    %457 = vrot.lane.b32.xlu0 %v444, 2
    %v458 = vpop.permute.xlu0 %457
    %v461 = vsel %vm71, 0.0, %v456
    %v462 = vsel %vm71, 0.0, %v458
    %463 = vrot.lane.b32.xlu0 %v443, 1
    %v464 = vpop.permute.xlu0 %463
    %465 = vrot.lane.b32.xlu0 %v444, 1
    %v466 = vpop.permute.xlu0 %465
    %v469 = vsel %vm80, 0.0, %v464
    %v470 = vsel %vm80, 0.0, %v466
    %471 = vrot.lane.b32.xlu0 %v443, 127
    %v472 = vpop.permute.xlu0 %471
    %473 = vrot.lane.b32.xlu0 %v444, 127
    %v474 = vpop.permute.xlu0 %473
    %v477 = vsel %vm89, %v472, 0.0
    %v478 = vsel %vm89, %v474, 0.0
    %479 = vrot.lane.b32.xlu0 %v443, 126
    %v480 = vpop.permute.xlu0 %479
    %481 = vrot.lane.b32.xlu0 %v444, 126
    %v482 = vpop.permute.xlu0 %481
    %v485 = vsel %vm98, %v480, 0.0
    %v486 = vsel %vm98, %v482, 0.0
    %487 = vrot.lane.b32.xlu0 %v443, 125
    %v488 = vpop.permute.xlu0 %487
    %489 = vrot.lane.b32.xlu0 %v444, 125
    %v490 = vpop.permute.xlu0 %489
    %v493 = vsel %vm107, %v488, 0.0
    %v494 = vsel %vm107, %v490, 0.0
    %495 = vrot.lane.b32.xlu0 %v443, 124
    %v496 = vpop.permute.xlu0 %495
    %497 = vrot.lane.b32.xlu0 %v444, 124
    %v498 = vpop.permute.xlu0 %497
    %v501 = vsel %vm116, %v496, 0.0
    %v502 = vsel %vm116, %v498, 0.0
    %v503 = vld [vmem:[%s5] sm:$0xf]
    %v504 = vpack.c.bf16 %v461, %v453
    %v505 = vpack.c.bf16 %v443, %v469
    %v506 = vpack.c.bf16 %v485, %v477
    %v507 = vpack.c.bf16 %v501, %v493
    %v508 = vpack.c.bf16 %v462, %v454
    %v509 = vpack.c.bf16 %v444, %v470
    %v510 = vpack.c.bf16 %v486, %v478
    %v511 = vpack.c.bf16 %v502, %v494
    %v512 = vld [vmem:[%s6] sm:$0xff]
    %514 = vset.pattern.permute.xlu0 0
    %515 = vperm.xlu0 %514, %v512
    %v516 = vpop.permute.xlu0 %515
    %v519 = vsel %vm134, %v503, 0
    %521 = vmatprep.subr.bf16.mxu0 0
    %522 = vmatpush1.bf16.msra.mxu0 %v504
    %523 = vmatprep.subr.bf16.mxu0 0
    %524 = vmatpush1.bf16.msra.mxu0 %v505
    %525 = vmatprep.subr.bf16.mxu0 0
    %526 = vmatpush1.bf16.msra.mxu0 %v506
    %527 = vmatprep.subr.bf16.mxu0 0
    %528 = vmatpush1.bf16.msra.mxu0 %v507
    %529 = vmatprep.subr.bf16.mxu0 0
    %530 = vmatpush1.bf16.msra.mxu0 0
    %531 = vmatprep.subr.bf16.mxu0 0
    %532 = vmatpush1.bf16.msra.mxu0 0
    %533 = vmatprep.subr.bf16.mxu0 0
    %534 = vmatpush1.bf16.msra.mxu0 0
    %535 = vmatprep.subr.bf16.mxu0 0
    %536 = vmatpush1.bf16.msra.mxu0 0
    %537 = vmatprep.subr.bf16.mxu0 0
    %538 = vmatpush1.bf16.msra.mxu0 0
    %539 = vmatprep.subr.bf16.mxu0 0
    %540 = vmatpush1.bf16.msra.mxu0 0
    %541 = vmatprep.subr.bf16.mxu0 0
    %542 = vmatpush1.bf16.msra.mxu0 0
    %543 = vmatprep.subr.bf16.mxu0 0
    %544 = vmatpush1.bf16.msra.mxu0 0
    %545 = vmatprep.subr.bf16.mxu0 0
    %546 = vmatpush1.bf16.msra.mxu0 0
    %547 = vmatprep.subr.bf16.mxu0 0
    %548 = vmatpush1.bf16.msra.mxu0 0
    %549 = vmatprep.subr.bf16.mxu0 0
    %550 = vmatpush1.bf16.msra.mxu0 0
    %551 = vmatprep.subr.bf16.mxu0 0
    %552 = vmatpush1.bf16.msra.mxu0 0
    %553 = vmatprep.mubr.bf16.mxu0 0
    %554 = vmatmul.mubr.bf16.gmra.mrb[0].mxu0 %v519
    %v555 = vpop.f32.mrb[0].mxu0
    %v556 = vadd.f32 %v516, %v555
    %v557 = vpop.f32.mrb[0].mxu0
    %v558 = vpop.f32.mrb[0].mxu0
    %v559 = vpop.f32.mrb[0].mxu0
    %560 = vdwg.mxu0
    %561 = vmatprep.subr.bf16.mxu0 0
    %562 = vmatpush1.bf16.msra.mxu0 %v508
    %563 = vmatprep.subr.bf16.mxu0 0
    %564 = vmatpush1.bf16.msra.mxu0 %v509
    %565 = vmatprep.subr.bf16.mxu0 0
    %566 = vmatpush1.bf16.msra.mxu0 %v510
    %567 = vmatprep.subr.bf16.mxu0 0
    %568 = vmatpush1.bf16.msra.mxu0 %v511
    %569 = vmatprep.subr.bf16.mxu0 0
    %570 = vmatpush1.bf16.msra.mxu0 0
    %571 = vmatprep.subr.bf16.mxu0 0
    %572 = vmatpush1.bf16.msra.mxu0 0
    %573 = vmatprep.subr.bf16.mxu0 0
    %574 = vmatpush1.bf16.msra.mxu0 0
    %575 = vmatprep.subr.bf16.mxu0 0
    %576 = vmatpush1.bf16.msra.mxu0 0
    %577 = vmatprep.subr.bf16.mxu0 0
    %578 = vmatpush1.bf16.msra.mxu0 0
    %579 = vmatprep.subr.bf16.mxu0 0
    %580 = vmatpush1.bf16.msra.mxu0 0
    %581 = vmatprep.subr.bf16.mxu0 0
    %582 = vmatpush1.bf16.msra.mxu0 0
    %583 = vmatprep.subr.bf16.mxu0 0
    %584 = vmatpush1.bf16.msra.mxu0 0
    %585 = vmatprep.subr.bf16.mxu0 0
    %586 = vmatpush1.bf16.msra.mxu0 0
    %587 = vmatprep.subr.bf16.mxu0 0
    %588 = vmatpush1.bf16.msra.mxu0 0
    %589 = vmatprep.subr.bf16.mxu0 0
    %590 = vmatpush1.bf16.msra.mxu0 0
    %591 = vmatprep.subr.bf16.mxu0 0
    %592 = vmatpush1.bf16.msra.mxu0 0
    %593 = vmatprep.mubr.bf16.mxu0 0
    %594 = vmatmul.mubr.bf16.gmra.mrb[0].mxu0 %v519
    %v595 = vpop.f32.mrb[0].mxu0
    %v596 = vadd.f32 %v516, %v595
    %v597 = vpop.f32.mrb[0].mxu0
    %v598 = vpop.f32.mrb[0].mxu0
    %v599 = vpop.f32.mrb[0].mxu0
    %600 = vdwg.mxu0
    %v601 = vsel %vm218, %v556, 0.0
    %602 = vadd.xlane.f32.xlu0 %v601
    %v603 = vpop.xlane.xlu0 %602
    %v604 = vsel %vm218, %v596, 0.0
    %605 = vadd.xlane.f32.xlu0 %v604
    %v606 = vpop.xlane.xlu0 %605
    %v607 = vadd.f32 %v603, %v606
    %v608 = vmul.f32 %v607, 0.03125
    %v609 = vmul.f32 %v556, %v556
    %v610 = vmul.f32 %v596, %v596
    %v611 = vsel %vm218, %v609, 0.0
    %612 = vadd.xlane.f32.xlu0 %v611
    %v613 = vpop.xlane.xlu0 %612
    %v614 = vsel %vm218, %v610, 0.0
    %615 = vadd.xlane.f32.xlu0 %v614
    %v616 = vpop.xlane.xlu0 %615
    %v617 = vadd.f32 %v613, %v616
    %v618 = vmul.f32 %v617, 0.03125
    %v619 = vmul.f32 %v608, %v608
    %v620 = vsub.f32 %v618, %v619
    %v621 = vmax.f32 %v620, 0.0
    %v622 = vld [vmem:[%s13] sm:$0xff]
    %v623 = vadd.f32 %v621, 1e-05
    %v624 = vrsqrt.pop %v623
    %v625 = vmul.f32 %v622, %v624
    %v626 = vld [vmem:[%s14] sm:$0xff]
    %v627 = vmul.f32 %v608, %v625
    %v628 = vsub.f32 %v626, %v627
    %630 = vset.pattern.permute.xlu0 0
    %631 = vperm.xlu0 %630, %v625
    %v632 = vpop.permute.xlu0 %631
    %v634 = vmul.f32 %v556, %v632
    %v635 = vmul.f32 %v596, %v632
    %637 = vset.pattern.permute.xlu0 0
    %638 = vperm.xlu0 %637, %v628
    %v639 = vpop.permute.xlu0 %638
    %v641 = vadd.f32 %v634, %v639
    %v642 = vadd.f32 %v635, %v639
    %v643 = vld [vmem:[%s7] sm:$0xf]
    %v644 = vpack.c.bf16 %v52, %v52
    %v645 = vpack.c.bf16 %v53, %v53
    %v646 = vld [vmem:[%s8] sm:$0xff]
    %648 = vset.pattern.permute.xlu0 0
    %649 = vperm.xlu0 %648, %v646
    %v650 = vpop.permute.xlu0 %649
    %vm652 = vcmask 64512
    %v654 = vsel %vm652, %v643, 0
    %v657 = vsel %vm314, %v644, 0
    %659 = vmatprep.subr.bf16.mxu0 0
    %660 = vmatpush1.bf16.msra.mxu0 %v657
    %661 = vmatprep.subr.bf16.mxu0 0
    %662 = vmatpush1.bf16.msra.mxu0 0
    %663 = vmatprep.subr.bf16.mxu0 0
    %664 = vmatpush1.bf16.msra.mxu0 0
    %665 = vmatprep.subr.bf16.mxu0 0
    %666 = vmatpush1.bf16.msra.mxu0 0
    %667 = vmatprep.subr.bf16.mxu0 0
    %668 = vmatpush1.bf16.msra.mxu0 0
    %669 = vmatprep.subr.bf16.mxu0 0
    %670 = vmatpush1.bf16.msra.mxu0 0
    %671 = vmatprep.subr.bf16.mxu0 0
    %672 = vmatpush1.bf16.msra.mxu0 0
    %673 = vmatprep.subr.bf16.mxu0 0
    %674 = vmatpush1.bf16.msra.mxu0 0
    %675 = vmatprep.subr.bf16.mxu0 0
    %676 = vmatpush1.bf16.msra.mxu0 0
    %677 = vmatprep.subr.bf16.mxu0 0
    %678 = vmatpush1.bf16.msra.mxu0 0
    %679 = vmatprep.subr.bf16.mxu0 0
    %680 = vmatpush1.bf16.msra.mxu0 0
    %681 = vmatprep.subr.bf16.mxu0 0
    %682 = vmatpush1.bf16.msra.mxu0 0
    %683 = vmatprep.subr.bf16.mxu0 0
    %684 = vmatpush1.bf16.msra.mxu0 0
    %685 = vmatprep.subr.bf16.mxu0 0
    %686 = vmatpush1.bf16.msra.mxu0 0
    %687 = vmatprep.subr.bf16.mxu0 0
    %688 = vmatpush1.bf16.msra.mxu0 0
    %689 = vmatprep.subr.bf16.mxu0 0
    %690 = vmatpush1.bf16.msra.mxu0 0
    %691 = vmatprep.mubr.bf16.mxu0 0
    %692 = vmatmul.mubr.bf16.gmra.mrb[0].mxu0 %v654
    %v693 = vpop.f32.mrb[0].mxu0
    %v694 = vadd.f32 %v650, %v693
    %v695 = vpop.f32.mrb[0].mxu0
    %v696 = vpop.f32.mrb[0].mxu0
    %v697 = vpop.f32.mrb[0].mxu0
    %698 = vdwg.mxu0
    %v700 = vsel %vm314, %v645, 0
    %702 = vmatprep.subr.bf16.mxu0 0
    %703 = vmatpush1.bf16.msra.mxu0 %v700
    %704 = vmatprep.subr.bf16.mxu0 0
    %705 = vmatpush1.bf16.msra.mxu0 0
    %706 = vmatprep.subr.bf16.mxu0 0
    %707 = vmatpush1.bf16.msra.mxu0 0
    %708 = vmatprep.subr.bf16.mxu0 0
    %709 = vmatpush1.bf16.msra.mxu0 0
    %710 = vmatprep.subr.bf16.mxu0 0
    %711 = vmatpush1.bf16.msra.mxu0 0
    %712 = vmatprep.subr.bf16.mxu0 0
    %713 = vmatpush1.bf16.msra.mxu0 0
    %714 = vmatprep.subr.bf16.mxu0 0
    %715 = vmatpush1.bf16.msra.mxu0 0
    %716 = vmatprep.subr.bf16.mxu0 0
    %717 = vmatpush1.bf16.msra.mxu0 0
    %718 = vmatprep.subr.bf16.mxu0 0
    %719 = vmatpush1.bf16.msra.mxu0 0
    %720 = vmatprep.subr.bf16.mxu0 0
    %721 = vmatpush1.bf16.msra.mxu0 0
    %722 = vmatprep.subr.bf16.mxu0 0
    %723 = vmatpush1.bf16.msra.mxu0 0
    %724 = vmatprep.subr.bf16.mxu0 0
    %725 = vmatpush1.bf16.msra.mxu0 0
    %726 = vmatprep.subr.bf16.mxu0 0
    %727 = vmatpush1.bf16.msra.mxu0 0
    %728 = vmatprep.subr.bf16.mxu0 0
    %729 = vmatpush1.bf16.msra.mxu0 0
    %730 = vmatprep.subr.bf16.mxu0 0
    %731 = vmatpush1.bf16.msra.mxu0 0
    %732 = vmatprep.subr.bf16.mxu0 0
    %733 = vmatpush1.bf16.msra.mxu0 0
    %734 = vmatprep.mubr.bf16.mxu0 0
    %735 = vmatmul.mubr.bf16.gmra.mrb[0].mxu0 %v654
    %v736 = vpop.f32.mrb[0].mxu0
    %v737 = vadd.f32 %v650, %v736
    %v738 = vpop.f32.mrb[0].mxu0
    %v739 = vpop.f32.mrb[0].mxu0
    %v740 = vpop.f32.mrb[0].mxu0
    %741 = vdwg.mxu0
    %v742 = vsel %vm218, %v694, 0.0
    %743 = vadd.xlane.f32.xlu0 %v742
    %v744 = vpop.xlane.xlu0 %743
    %v745 = vsel %vm218, %v737, 0.0
    %746 = vadd.xlane.f32.xlu0 %v745
    %v747 = vpop.xlane.xlu0 %746
    %v748 = vadd.f32 %v744, %v747
    %v749 = vmul.f32 %v748, 0.03125
    %v750 = vmul.f32 %v694, %v694
    %v751 = vmul.f32 %v737, %v737
    %v752 = vsel %vm218, %v750, 0.0
    %753 = vadd.xlane.f32.xlu0 %v752
    %v754 = vpop.xlane.xlu0 %753
    %v755 = vsel %vm218, %v751, 0.0
    %756 = vadd.xlane.f32.xlu0 %v755
    %v757 = vpop.xlane.xlu0 %756
    %v758 = vadd.f32 %v754, %v757
    %v759 = vmul.f32 %v758, 0.03125
    %v760 = vmul.f32 %v749, %v749
    %v761 = vsub.f32 %v759, %v760
    %v762 = vmax.f32 %v761, 0.0
    %v763 = vld [vmem:[%s9] sm:$0xff]
    %v764 = vadd.f32 %v762, 1e-05
    %v765 = vrsqrt.pop %v764
    %v766 = vmul.f32 %v763, %v765
    %v767 = vld [vmem:[%s10] sm:$0xff]
    %v768 = vmul.f32 %v749, %v766
    %v769 = vsub.f32 %v767, %v768
    %771 = vset.pattern.permute.xlu0 0
    %772 = vperm.xlu0 %771, %v766
    %v773 = vpop.permute.xlu0 %772
    %v775 = vmul.f32 %v694, %v773
    %v776 = vmul.f32 %v737, %v773
    %778 = vset.pattern.permute.xlu0 0
    %779 = vperm.xlu0 %778, %v769
    %v780 = vpop.permute.xlu0 %779
    %v782 = vadd.f32 %v775, %v780
    %v783 = vadd.f32 %v776, %v780
    %v784 = vadd.f32 %v641, %v782
    %v785 = vadd.f32 %v642, %v783
    %v786 = vmax.f32 %v784, 0.0
    %v787 = vmax.f32 %v785, 0.0
    %788 = vst.msk [vmem:[#allocation2] sm:$0xff] %vm218, %v786
    %789 = vst.msk [vmem:[#allocation2 + $0x8] sm:$0xff] %vm218, %v787
    // Predicated region
    $region62: #{tpu_custom_call.1} parent=1 // pred_check
      _
    $region63: #{tpu_custom_call.1} parent=1 // pred_check_branch
      %791 = sbr.rel (0) target = $region65
    $region64: #{tpu_custom_call.1} parent=1 // pred_region
      %s793 = ssub.s32 256, 256
      %794 = vsyncadd [#allocation3], %s793
      %s795 = sshll.u32 [#allocation2], 4
      %s796 = int_to_ptr.vmem [resolvable:$true] %s795
      %801 = dma.vmem_to_hbm [thread:$0]  %s796, 256, %s15, [#allocation3], 128, 128, 8
    $region65: #{tpu_custom_call.1} parent=1 // pred_fallthru
      _
    // Predicated region
    $region66: #{tpu_custom_call.1} parent=1 // pred_check
      _
    $region67: #{tpu_custom_call.1} parent=1 // pred_check_branch
      %803 = sbr.rel (0) target = $region69
    $region68: #{tpu_custom_call.1} parent=1 // pred_region
      %804 = dma.done [#allocation3], 256
    $region69: #{tpu_custom_call.1} parent=1 // pred_fallthru
      _
    %805 = vsyncpa [#allocation3], 1

</llo_original>
